<compile_context>
chip_gen: v7x
topology: tpu7x:2x2x1
jax: 0.10.0
libtpu: 0.0.40
codegen_flags: <defaults>
</compile_context>

<pallas_src>
import jax
import jax.numpy as jnp
from jax import lax
from jax.experimental import pallas as pl
from jax.experimental.pallas import tpu as pltpu


def _round_up(n, m):
    return (n + m - 1) // m * m


def postdnn_kernel(x_ref, w1_ref, bw_ref, b2_ref, out_ref):
    # x_ref : (TB, K) f32  streamed batch tile, natural layout (no pad, no transpose)
    # w1_ref: (H, K)  f32  resident layer-1 weight, PyTorch (out, in) layout
    # bw_ref: (H, 2)  f32  resident packed params: column 0 = b1, column 1 = w2 row
    # b2_ref: (1, 1)  f32  layer-2 bias scalar in SMEM
    # out_ref: (2, TB) f32  row 0 = logits, row 1 = sigmoid(logits)  (lane-dense)
    x = x_ref[...].astype(jnp.bfloat16)
    w1 = w1_ref[...].astype(jnp.bfloat16)

    # Layer 1 on the MXU: contract K = last dim of BOTH operands (transposed-RHS
    # matmul), so h comes out as (H, TB) with batch on lanes -- no transpose of x.
    h = lax.dot_general(w1, x, dimension_numbers=(((1,), (1,)), ((), ())),
                        preferred_element_type=jnp.float32)

    b1 = bw_ref[:, 0:1]                          # (H, 1) f32
    w2 = bw_ref[:, 1:2]                          # (H, 1) f32
    h = jnp.maximum(h + b1, 0.0)                 # bias + ReLU on the VPU (f32)

    # Layer 2 (num_classes == 1): VPU broadcast-multiply + sublane reduction (XLU).
    z = jnp.sum(h * w2, axis=0, keepdims=True) + b2_ref[0, 0]     # (1, TB)

    out_ref[0:1, :] = z                                  # logits row (lane-dense)
    out_ref[1:2, :] = 1.0 / (1.0 + jnp.exp(-z))          # sigmoid (exp on the EUP)


def postdnn_forward(x, w1, b1, w2, b2, *, batch_tile=2048):
    """x: (B, K) f32.  PyTorch-layout params: w1 (H, K), b1 (H,), w2 (C, H), b2 (C,).

    Returns (logits, sigmoid), both shape (B,), matching PostDNN.forward.
    """
    B, K = x.shape
    H = w1.shape[0]
    C = w2.shape[0]
    # TODO(synk): generalize to num_classes > 1 (needs a class-tiled output); the
    # PyTorch module's squeeze(-1) semantics really target the default C == 1.
    assert C == 1, "kernel specializes the module default num_classes == 1"

    batch_tile = max(128, _round_up(batch_tile, 128))
    # Keep >= 2 grid steps whenever B allows it so v7x's two TensorCores both work.
    tb = min(batch_tile, max(128, _round_up(pl.cdiv(B, 2), 128)))
    b_pad = _round_up(B, tb)
    grid = (b_pad // tb,)

    xp = x.astype(jnp.float32)
    if b_pad != B:
        xp = jnp.pad(xp, ((0, b_pad - B), (0, 0)))         # pad batch only; K untouched
    w1f = w1.astype(jnp.float32)                            # (H, K) resident
    bw = jnp.stack([b1, w2[0]], axis=1).astype(jnp.float32)  # (H, 2) resident [b1 | w2]
    b2s = b2.astype(jnp.float32).reshape(1, 1)              # (1, 1) -> SMEM scalar

    cost = pl.CostEstimate(
        flops=2 * b_pad * K * H + 4 * b_pad * H,
        transcendentals=b_pad,
        bytes_accessed=b_pad * K * 4 + 2 * b_pad * 4 + (H * K + 2 * H + 1) * 4,
    )

    out = pl.pallas_call(
        postdnn_kernel,
        out_shape=jax.ShapeDtypeStruct((2, b_pad), jnp.float32),
        grid=grid,
        in_specs=[
            pl.BlockSpec((tb, K), lambda i: (i, 0)),            # x: streamed batch tiles
            pl.BlockSpec((H, K), lambda i: (0, 0)),             # W1: resident
            pl.BlockSpec((H, 2), lambda i: (0, 0)),             # [b1 | w2]: resident
            pl.BlockSpec(memory_space=pltpu.MemorySpace.SMEM),  # b2 scalar in SMEM
        ],
        out_specs=pl.BlockSpec((2, tb), lambda i: (0, i)),      # lane-dense combined out
        compiler_params=pltpu.CompilerParams(
            dimension_semantics=("parallel",),                  # batch axis -> 2 TCs on v7x
        ),
        cost_estimate=cost,
    )(xp, w1f, bw, b2s)

    logits = out[0, :B]      # torch: linear_out.squeeze(-1) -> (B,)
    sigmoid = out[1, :B]     # torch: sigmoid(linear_out)    -> (B,)
    return logits, sigmoid


def init_params(key, input_size, hidden_size, num_classes=1):
    # nn.Linear init: uniform(-1/sqrt(fan_in), 1/sqrt(fan_in)), PyTorch (out, in) layout.
    k1, k2, k3, k4 = jax.random.split(key, 4)
    bnd1 = 1.0 / jnp.sqrt(input_size)
    bnd2 = 1.0 / jnp.sqrt(hidden_size)
    w1 = jax.random.uniform(k1, (hidden_size, input_size), jnp.float32, -bnd1, bnd1)
    b1 = jax.random.uniform(k2, (hidden_size,), jnp.float32, -bnd1, bnd1)
    w2 = jax.random.uniform(k3, (num_classes, hidden_size), jnp.float32, -bnd2, bnd2)
    b2 = jax.random.uniform(k4, (num_classes,), jnp.float32, -bnd2, bnd2)
    return w1, b1, w2, b2


if __name__ == "__main__":
    key = jax.random.PRNGKey(0)
    B, input_size, hidden_size, num_classes = 8, 32, 64, 1

    kx, kp = jax.random.split(key)
    x = jax.random.normal(kx, (B, input_size), jnp.float32)
    w1, b1, w2, b2 = init_params(kp, input_size, hidden_size, num_classes)

    fwd = jax.jit(postdnn_forward)
    logits, sig = fwd(x, w1, b1, w2, b2)
    jax.block_until_ready((logits, sig))

    # Pure-JAX reference with the same bf16 operand rounding / f32 accumulation
    # for layer 1 (layer 2 and the epilogue are f32 in the kernel).
    xm = x.astype(jnp.bfloat16).astype(jnp.float32)
    w1m = w1.astype(jnp.bfloat16).astype(jnp.float32)
    h_ref = jnp.maximum(xm @ w1m.T + b1, 0.0)
    z_ref = (h_ref @ w2.T + b2)[:, 0]
    s_ref = jax.nn.sigmoid(z_ref)

    assert logits.shape == (B,) and sig.shape == (B,)
    assert jnp.allclose(logits, z_ref, atol=2e-3, rtol=2e-3)
    assert jnp.allclose(sig, s_ref, atol=2e-3, rtol=2e-3)

    print("KERNEL_OK")
</pallas_src>

<mosaic_0001>
module attributes {stable_mosaic.version = 11 : i64} {
  func.func @postdnn_kernel(%arg0: i32, %arg1: memref<128x32xf32, #tpu.memory_space<vmem>>, %arg2: memref<64x32xf32, #tpu.memory_space<vmem>>, %arg3: memref<64x2xf32, #tpu.memory_space<vmem>>, %arg4: memref<1x1xf32, #tpu.memory_space<smem>>, %arg5: memref<2x128xf32, #tpu.memory_space<vmem>>) attributes {dimension_semantics = [#tpu.dimension_semantics<parallel>], iteration_bounds = array<i64: 1>, scalar_prefetch = 0 : i64, scratch_operands = 0 : i64, tpu.core_type = #tpu.core_type<tc>, window_params = [{transform_indices = @transform_0, window_bounds = array<i64: 128, 32>}, {pipeline_mode = #tpu.pipeline_mode<synchronous>, transform_indices = @transform_1, window_bounds = array<i64: 64, 32>}, {pipeline_mode = #tpu.pipeline_mode<synchronous>, transform_indices = @transform_2, window_bounds = array<i64: 64, 2>}, {transform_indices = @transform_3, window_bounds = array<i64: 1, 1>}, {transform_indices = @transform_4, window_bounds = array<i64: 2, 128>}]} {
    %c0 = arith.constant 0 : index
    %c0_0 = arith.constant 0 : index
    %0 = vector.load %arg1[%c0, %c0_0] : memref<128x32xf32, #tpu.memory_space<vmem>>, vector<128x32xf32>
    %1 = arith.truncf %0 : vector<128x32xf32> to vector<128x32xbf16>
    %c0_1 = arith.constant 0 : index
    %c0_2 = arith.constant 0 : index
    %2 = vector.load %arg2[%c0_1, %c0_2] : memref<64x32xf32, #tpu.memory_space<vmem>>, vector<64x32xf32>
    %3 = arith.truncf %2 : vector<64x32xf32> to vector<64x32xbf16>
    %cst = arith.constant dense<0.000000e+00> : vector<64x128xf32>
    %4 = tpu.matmul %3, %1, %cst {dimension_numbers = #tpu.dot_dimension_numbers<[1], [1], [0], [0], [0, 0, 1, 0], [], []>} : vector<64x32xbf16>, vector<128x32xbf16>, vector<64x128xf32> -> vector<64x128xf32>
    %c0_3 = arith.constant 0 : index
    %c0_4 = arith.constant 0 : index
    %5 = vector.load %arg3[%c0_3, %c0_4] : memref<64x2xf32, #tpu.memory_space<vmem>>, vector<64x1xf32>
    %c0_5 = arith.constant 0 : index
    %c1 = arith.constant 1 : index
    %6 = vector.load %arg3[%c0_5, %c1] : memref<64x2xf32, #tpu.memory_space<vmem>>, vector<64x1xf32>
    %7 = vector.broadcast %5 : vector<64x1xf32> to vector<64x128xf32>
    %8 = arith.addf %4, %7 : vector<64x128xf32>
    %cst_6 = arith.constant 0.000000e+00 : f32
    %9 = vector.broadcast %cst_6 : f32 to vector<64x128xf32>
    %10 = arith.maximumf %8, %9 : vector<64x128xf32>
    %11 = vector.broadcast %6 : vector<64x1xf32> to vector<64x128xf32>
    %12 = arith.mulf %10, %11 : vector<64x128xf32>
    %cst_7 = arith.constant dense<0.000000e+00> : vector<128xf32>
    %13 = vector.multi_reduction <add>, %12, %cst_7 [0] : vector<64x128xf32> to vector<128xf32>
    %14 = vector.shape_cast %13 : vector<128xf32> to vector<1x128xf32>
    %c0_8 = arith.constant 0 : index
    %c0_9 = arith.constant 0 : index
    %15 = memref.load %arg4[%c0_8, %c0_9] : memref<1x1xf32, #tpu.memory_space<smem>>
    %16 = vector.broadcast %15 : f32 to vector<1x128xf32>
    %17 = arith.addf %14, %16 : vector<1x128xf32>
    %c0_10 = arith.constant 0 : index
    %c0_11 = arith.constant 0 : index
    %18 = vector.load %arg5[%c0_10, %c0_11] : memref<2x128xf32, #tpu.memory_space<vmem>>, vector<1x128xf32>
    tpu.vector_store %arg5[%c0_10, %c0_11], %17 {strides = array<i32>} : memref<2x128xf32, #tpu.memory_space<vmem>>, vector<1x128xf32>,
    %cst_12 = arith.constant 0.000000e+00 : f32
    %19 = vector.broadcast %cst_12 : f32 to vector<1x128xf32>
    %20 = arith.subf %19, %17 : vector<1x128xf32>
    %21 = math.exp %20 : vector<1x128xf32>
    %cst_13 = arith.constant 1.000000e+00 : f32
    %22 = vector.broadcast %cst_13 : f32 to vector<1x128xf32>
    %23 = arith.addf %22, %21 : vector<1x128xf32>
    %cst_14 = arith.constant 1.000000e+00 : f32
    %24 = vector.broadcast %cst_14 : f32 to vector<1x128xf32>
    %25 = arith.divf %24, %23 : vector<1x128xf32>
    %c1_15 = arith.constant 1 : index
    %c0_16 = arith.constant 0 : index
    %26 = vector.load %arg5[%c1_15, %c0_16] : memref<2x128xf32, #tpu.memory_space<vmem>>, vector<1x128xf32>
    tpu.vector_store %arg5[%c1_15, %c0_16], %25 {strides = array<i32>} : memref<2x128xf32, #tpu.memory_space<vmem>>, vector<1x128xf32>,
    return
  }
  func.func @transform_0(%arg0: i32) -> (i32, i32) {
    %c0_i32 = arith.constant 0 : i32
    %c0_i32_0 = arith.constant 0 : i32
    return %arg0, %c0_i32 : i32, i32
  }
  func.func @transform_1(%arg0: i32) -> (i32, i32) {
    %c0_i32 = arith.constant 0 : i32
    %c0_i32_0 = arith.constant 0 : i32
    %c0_i32_1 = arith.constant 0 : i32
    return %c0_i32, %c0_i32_0 : i32, i32
  }
  func.func @transform_2(%arg0: i32) -> (i32, i32) {
    %c0_i32 = arith.constant 0 : i32
    %c0_i32_0 = arith.constant 0 : i32
    %c0_i32_1 = arith.constant 0 : i32
    return %c0_i32, %c0_i32_0 : i32, i32
  }
  func.func @transform_3(%arg0: i32) -> (i32, i32) {
    %c0_i32 = arith.constant 0 : i32
    %c0_i32_0 = arith.constant 0 : i32
    %c0_i32_1 = arith.constant 0 : i32
    return %c0_i32, %c0_i32_0 : i32, i32
  }
  func.func @transform_4(%arg0: i32) -> (i32, i32) {
    %c0_i32 = arith.constant 0 : i32
    %c0_i32_0 = arith.constant 0 : i32
    return %c0_i32, %arg0 : i32, i32
  }
}

</mosaic_0001>

<llo_original>
// kernel: postdnn_forward.1
$region0: #{postdnn_forward.1}
  #allocation0 [shape = 'u32[]', space=smem, size = 0x4, offset = 0x4, fixed_abs, tag = 'smem constant byte address 0x4 - core index']
  #allocation1 [shape = 'u32[144,128]{1,0:T(1,128)}', space=vmem, size = 0x12000, scoped, tag = 'internal scratch']
  #allocation2 [shape = 'f32[1,1]{1,0:T(1,128)S(6)}', space=smem, size = 0x200, scoped, tag = 'scoped memory for postdnn_forward.1']
  %s0 = inlined_call_operand.vmem [shape: f32[128,32], index: 0, kind: input, shape index: {}]
  %s1 = inlined_call_operand.vmem [shape: f32[64,32], index: 1, kind: input, shape index: {}]
  %s2 = inlined_call_operand.vmem [shape: f32[64,2], index: 2, kind: input, shape index: {}]
  %s3 = inlined_call_operand.<no memory space> [shape: f32[1,1], index: 3, kind: input, shape index: {}]
  %s4 = inlined_call_operand.vmem [shape: f32[2,128], index: 4, kind: output, shape index: {}]
  %s5 = sld [smem:[#allocation0]]
  $region26: #{postdnn_forward.1} parent=0
    _
  %s7 = ssub.s32 1, %s5
  %s8 = scalar_select 0, %s7, %s5
  %9 = sst [smem:[#allocation2]] %s3
  // Predicated region
  $region2: #{postdnn_forward.1} parent=0 // pred_check
    _
  $region3: #{postdnn_forward.1} parent=0 // pred_check_branch
    %11 = sbr.rel (0) target = $region5
  $region4: #{postdnn_forward.1} parent=0 // pred_region
    _
  $region5: #{postdnn_forward.1} parent=0 // pred_fallthru
    _
  // Predicated region
  $region6: #{postdnn_forward.1} parent=0 // pred_check
    _
  $region7: #{postdnn_forward.1} parent=0 // pred_check_branch
    %13 = sbr.rel (0) target = $region9
  $region8: #{postdnn_forward.1} parent=0 // pred_region
    _
  $region9: #{postdnn_forward.1} parent=0 // pred_fallthru
    _
  // Predicated region
  $region10: #{postdnn_forward.1} parent=0 // pred_check
    _
  $region11: #{postdnn_forward.1} parent=0 // pred_check_branch
    %15 = sbr.rel (0) target = $region13
  $region12: #{postdnn_forward.1} parent=0 // pred_region
    _
  $region13: #{postdnn_forward.1} parent=0 // pred_fallthru
    _
  // Predicated region
  $region14: #{postdnn_forward.1} parent=0 // pred_check
    _
  $region15: #{postdnn_forward.1} parent=0 // pred_check_branch
    %17 = sbr.rel (0) target = $region17
  $region16: #{postdnn_forward.1} parent=0 // pred_region
    _
  $region17: #{postdnn_forward.1} parent=0 // pred_fallthru
    _
  %v19 = vld [vmem:[%s0] sm:$0xff]
  %v20 = vld [vmem:[%s0 + $0x8] sm:$0xff]
  %v21 = vld [vmem:[%s0 + $0x10] sm:$0xff]
  %v22 = vld [vmem:[%s0 + $0x18] sm:$0xff]
  %v23 = vld [vmem:[%s0 + $0x20] sm:$0xff]
  %v24 = vld [vmem:[%s0 + $0x28] sm:$0xff]
  %v25 = vld [vmem:[%s0 + $0x30] sm:$0xff]
  %v26 = vld [vmem:[%s0 + $0x38] sm:$0xff]
  %v27 = vld [vmem:[%s0 + $0x40] sm:$0xff]
  %v28 = vld [vmem:[%s0 + $0x48] sm:$0xff]
  %v29 = vld [vmem:[%s0 + $0x50] sm:$0xff]
  %v30 = vld [vmem:[%s0 + $0x58] sm:$0xff]
  %v31 = vld [vmem:[%s0 + $0x60] sm:$0xff]
  %v32 = vld [vmem:[%s0 + $0x68] sm:$0xff]
  %v33 = vld [vmem:[%s0 + $0x70] sm:$0xff]
  %v34 = vld [vmem:[%s0 + $0x78] sm:$0xff]
  %v35 = vpack.c.bf16 %v20, %v19
  %v36 = vpack.c.bf16 %v22, %v21
  %v37 = vpack.c.bf16 %v24, %v23
  %v38 = vpack.c.bf16 %v26, %v25
  %v39 = vpack.c.bf16 %v28, %v27
  %v40 = vpack.c.bf16 %v30, %v29
  %v41 = vpack.c.bf16 %v32, %v31
  %v42 = vpack.c.bf16 %v34, %v33
  %v43 = vld [vmem:[%s1] sm:$0xff]
  %v44 = vld [vmem:[%s1 + $0x8] sm:$0xff]
  %v45 = vld [vmem:[%s1 + $0x10] sm:$0xff]
  %v46 = vld [vmem:[%s1 + $0x18] sm:$0xff]
  %v47 = vld [vmem:[%s1 + $0x20] sm:$0xff]
  %v48 = vld [vmem:[%s1 + $0x28] sm:$0xff]
  %v49 = vld [vmem:[%s1 + $0x30] sm:$0xff]
  %v50 = vld [vmem:[%s1 + $0x38] sm:$0xff]
  %v51 = vpack.c.bf16 %v44, %v43
  %v52 = vpack.c.bf16 %v46, %v45
  %v53 = vpack.c.bf16 %v48, %v47
  %v54 = vpack.c.bf16 %v50, %v49
  %v55 = vld [vmem:[%s2] sm:$0xff]
  %v56 = vld [vmem:[%s2 + $0x8] sm:$0xff]
  %v57 = vld [vmem:[%s2 + $0x10] sm:$0xff]
  %v58 = vld [vmem:[%s2 + $0x18] sm:$0xff]
  %v59 = vld [vmem:[%s2 + $0x20] sm:$0xff]
  %v60 = vld [vmem:[%s2 + $0x28] sm:$0xff]
  %v61 = vld [vmem:[%s2 + $0x30] sm:$0xff]
  %v62 = vld [vmem:[%s2 + $0x38] sm:$0xff]
  %64 = vset.pattern.permute.xlu0 0
  %65 = vperm.xlu0 %64, %v55
  %v66 = vpop.permute.xlu0 %65
  %69 = vset.pattern.permute.xlu0 0
  %70 = vperm.xlu0 %69, %v56
  %v71 = vpop.permute.xlu0 %70
  %74 = vset.pattern.permute.xlu0 0
  %75 = vperm.xlu0 %74, %v57
  %v76 = vpop.permute.xlu0 %75
  %79 = vset.pattern.permute.xlu0 0
  %80 = vperm.xlu0 %79, %v58
  %v81 = vpop.permute.xlu0 %80
  %84 = vset.pattern.permute.xlu0 0
  %85 = vperm.xlu0 %84, %v59
  %v86 = vpop.permute.xlu0 %85
  %89 = vset.pattern.permute.xlu0 0
  %90 = vperm.xlu0 %89, %v60
  %v91 = vpop.permute.xlu0 %90
  %94 = vset.pattern.permute.xlu0 0
  %95 = vperm.xlu0 %94, %v61
  %v96 = vpop.permute.xlu0 %95
  %99 = vset.pattern.permute.xlu0 0
  %100 = vperm.xlu0 %99, %v62
  %v101 = vpop.permute.xlu0 %100
  %vm103 = vcmask 261120
  %v105 = vsel %vm103, %v51, 0
  %v108 = vsel %vm103, %v52, 0
  %v111 = vsel %vm103, %v53, 0
  %v114 = vsel %vm103, %v54, 0
  %v117 = vsel %vm103, %v35, 0
  %v120 = vsel %vm103, %v36, 0
  %v123 = vsel %vm103, %v37, 0
  %v126 = vsel %vm103, %v38, 0
  %v129 = vsel %vm103, %v39, 0
  %v132 = vsel %vm103, %v40, 0
  %v135 = vsel %vm103, %v41, 0
  %v138 = vsel %vm103, %v42, 0
  %140 = vmatprep.subr.bf16.mxu0 0
  %141 = vmatpush1.bf16.xpose.msra.mxu0 %v117
  %142 = vmatprep.subr.bf16.mxu0 0
  %143 = vmatpush1.bf16.xpose.msra.mxu0 %v120
  %144 = vmatprep.subr.bf16.mxu0 0
  %145 = vmatpush1.bf16.xpose.msra.mxu0 %v123
  %146 = vmatprep.subr.bf16.mxu0 0
  %147 = vmatpush1.bf16.xpose.msra.mxu0 %v126
  %148 = vmatprep.subr.bf16.mxu0 0
  %149 = vmatpush1.bf16.xpose.msra.mxu0 %v129
  %150 = vmatprep.subr.bf16.mxu0 0
  %151 = vmatpush1.bf16.xpose.msra.mxu0 %v132
  %152 = vmatprep.subr.bf16.mxu0 0
  %153 = vmatpush1.bf16.xpose.msra.mxu0 %v135
  %154 = vmatprep.subr.bf16.mxu0 0
  %155 = vmatpush1.bf16.xpose.msra.mxu0 %v138
  %156 = vmatprep.subr.bf16.mxu0 0
  %157 = vmatpush1.bf16.xpose.msra.mxu0 0
  %158 = vmatprep.subr.bf16.mxu0 0
  %159 = vmatpush1.bf16.xpose.msra.mxu0 0
  %160 = vmatprep.subr.bf16.mxu0 0
  %161 = vmatpush1.bf16.xpose.msra.mxu0 0
  %162 = vmatprep.subr.bf16.mxu0 0
  %163 = vmatpush1.bf16.xpose.msra.mxu0 0
  %164 = vmatprep.subr.bf16.mxu0 0
  %165 = vmatpush1.bf16.xpose.msra.mxu0 0
  %166 = vmatprep.subr.bf16.mxu0 0
  %167 = vmatpush1.bf16.xpose.msra.mxu0 0
  %168 = vmatprep.subr.bf16.mxu0 0
  %169 = vmatpush1.bf16.xpose.msra.mxu0 0
  %170 = vmatprep.subr.bf16.mxu0 0
  %171 = vmatpush1.bf16.xpose.msra.mxu0 0
  %172 = vmatprep.mubr.bf16.mxu0 0
  %173 = vmatmul.mubr.bf16.gmra.mrb[0].mxu0 %v105
  %v174 = vpop.f32.mrb[0].mxu0
  %v175 = vadd.f32 %v66, %v174
  %v176 = vpop.f32.mrb[0].mxu0
  %v177 = vpop.f32.mrb[0].mxu0
  %v178 = vadd.f32 %v71, %v177
  %v179 = vpop.f32.mrb[0].mxu0
  %180 = vmatprep.mubr.bf16.mxu0 0
  %181 = vmatmul.mubr.bf16.gmra.mrb[0].mxu0 %v108
  %v182 = vpop.f32.mrb[0].mxu0
  %v183 = vadd.f32 %v76, %v182
  %v184 = vpop.f32.mrb[0].mxu0
  %v185 = vpop.f32.mrb[0].mxu0
  %v186 = vadd.f32 %v81, %v185
  %v187 = vpop.f32.mrb[0].mxu0
  %188 = vmatprep.mubr.bf16.mxu0 0
  %189 = vmatmul.mubr.bf16.gmra.mrb[0].mxu0 %v111
  %v190 = vpop.f32.mrb[0].mxu0
  %v191 = vadd.f32 %v86, %v190
  %v192 = vpop.f32.mrb[0].mxu0
  %v193 = vpop.f32.mrb[0].mxu0
  %v194 = vadd.f32 %v91, %v193
  %v195 = vpop.f32.mrb[0].mxu0
  %196 = vmatprep.mubr.bf16.mxu0 0
  %197 = vmatmul.mubr.bf16.gmra.mrb[0].mxu0 %v114
  %v198 = vpop.f32.mrb[0].mxu0
  %v199 = vadd.f32 %v96, %v198
  %v200 = vpop.f32.mrb[0].mxu0
  %v201 = vpop.f32.mrb[0].mxu0
  %v202 = vadd.f32 %v101, %v201
  %v203 = vpop.f32.mrb[0].mxu0
  %204 = vdwg.mxu0
  %v205 = vmax.f32 %v175, 0.0
  %v206 = vmax.f32 %v178, 0.0
  %v207 = vmax.f32 %v183, 0.0
  %v208 = vmax.f32 %v186, 0.0
  %v209 = vmax.f32 %v191, 0.0
  %v210 = vmax.f32 %v194, 0.0
  %v211 = vmax.f32 %v199, 0.0
  %v212 = vmax.f32 %v202, 0.0
  %213 = vset.pattern.permute.xlu0 1
  %214 = vperm.xlu0 %213, %v55
  %v215 = vpop.permute.xlu0 %214
  %217 = vset.pattern.permute.xlu0 1
  %218 = vperm.xlu0 %217, %v56
  %v219 = vpop.permute.xlu0 %218
  %221 = vset.pattern.permute.xlu0 1
  %222 = vperm.xlu0 %221, %v57
  %v223 = vpop.permute.xlu0 %222
  %225 = vset.pattern.permute.xlu0 1
  %226 = vperm.xlu0 %225, %v58
  %v227 = vpop.permute.xlu0 %226
  %229 = vset.pattern.permute.xlu0 1
  %230 = vperm.xlu0 %229, %v59
  %v231 = vpop.permute.xlu0 %230
  %233 = vset.pattern.permute.xlu0 1
  %234 = vperm.xlu0 %233, %v60
  %v235 = vpop.permute.xlu0 %234
  %237 = vset.pattern.permute.xlu0 1
  %238 = vperm.xlu0 %237, %v61
  %v239 = vpop.permute.xlu0 %238
  %241 = vset.pattern.permute.xlu0 1
  %242 = vperm.xlu0 %241, %v62
  %v243 = vpop.permute.xlu0 %242
  %v245 = vmul.f32 %v205, %v215
  %v246 = vmul.f32 %v206, %v219
  %v247 = vmul.f32 %v207, %v223
  %v248 = vmul.f32 %v208, %v227
  %v249 = vmul.f32 %v209, %v231
  %v250 = vmul.f32 %v210, %v235
  %v251 = vmul.f32 %v211, %v239
  %v252 = vmul.f32 %v212, %v243
  %v253 = vadd.f32 %v245, %v246
  %v254 = vadd.f32 %v253, %v247
  %v255 = vadd.f32 %v254, %v248
  %v256 = vadd.f32 %v255, %v249
  %v257 = vadd.f32 %v256, %v250
  %v258 = vadd.f32 %v257, %v251
  %v259 = vadd.f32 %v258, %v252
  %v260 = vrot.slane %v259, 4
  %v261 = vadd.f32 %v259, %v260
  %v262 = vrot.slane %v261, 2
  %v263 = vadd.f32 %v261, %v262
  %v264 = vrot.slane %v263, 1
  %v265 = vadd.f32 %v263, %v264
  %s266 = sld [smem:[#allocation2]]
  %v267 = vstv %s266
  %v268 = vadd.f32 %v265, %v267
  %269 = vst [vmem:[%s4] sm:$0x1] %v268
  %v270 = vsub.f32 0.0, %v268
  %v271 = vmul.f32 %v270, 1.442695
  %v272 = vpow.pop %v271
  %v273 = vadd.f32 %v272, 1.0
  %v274 = vrcp.pop %v273
  %v275 = vmul.f32 1.0, %v274
  %276 = vst [vmem:[%s4 + $0x1] sm:$0x1] %v275
  // Predicated region
  $region18: #{postdnn_forward.1} parent=0 // pred_check
    _
  $region19: #{postdnn_forward.1} parent=0 // pred_check_branch
    %278 = sbr.rel (0) target = $region21
  $region20: #{postdnn_forward.1} parent=0 // pred_region
    _
  $region21: #{postdnn_forward.1} parent=0 // pred_fallthru
    _
  // Predicated region
  $region22: #{postdnn_forward.1} parent=0 // pred_check
    _
  $region23: #{postdnn_forward.1} parent=0 // pred_check_branch
    %280 = sbr.rel (0) target = $region25
  $region24: #{postdnn_forward.1} parent=0 // pred_region
    _
  $region25: #{postdnn_forward.1} parent=0 // pred_fallthru
    _

</llo_original>
